<compile_context>
chip_gen: v5e
topology: v5e:2x2
jax: 0.10.0
libtpu: 0.0.40
codegen_flags: <defaults>
</compile_context>

<pallas_src>
import functools
import math

import jax
import jax.numpy as jnp
from jax import lax
from jax.experimental import pallas as pl
from jax.experimental.pallas import tpu as pltpu

# TODO(synk): spread_lambda comes from get_subconfig('losses')['spread_lambda'];
# use a deterministic constant here.
SPREAD_LAMBDA = 0.5
EPS = 1e-8


def _round_up(x, m):
    return ((x + m - 1) // m) * m


def _vmem_limits():
    """(scoped vmem limit, per-input-buffer byte budget), generation-aware."""
    phys = 64 * 1024 * 1024                      # v7x physical; v5e/v6e have 128 MiB
    try:
        info = pltpu.get_tpu_info()
        cap = getattr(info, "vmem_capacity_bytes", None)
        if cap:
            phys = int(cap)
    except Exception:
        pass
    limit = min(48 * 1024 * 1024, (phys * 3) // 4)
    # 2 double-buffered input tiles + ~6 MiB of f32 sub-block temps / scratch / output.
    per_buf = (limit - 6 * 1024 * 1024) // 2
    per_buf = max(4 * 1024 * 1024, min(per_buf, 16 * 1024 * 1024))
    return limit, per_buf


def _pick_group_fold(batch, feat):
    """Lane fold (B, D) -> (B/G, G*D): prefer the smallest G with G*D % 128 == 0."""
    g0 = 128 // math.gcd(feat, 128)
    k = 1
    while k * g0 <= batch:
        g = k * g0
        if batch % g == 0:
            return g
        k += 1
    # Fallback (batch has no suitable divisor): partial lane density, G*D <= 512.
    # TODO(synk): could also pad features and mask them out of the final mean.
    best = 1
    cap = max(1, 512 // max(1, feat))
    for g in range(1, min(batch, cap) + 1):
        if batch % g == 0:
            best = g
    return best


def _plan(folded_rows, lane, itemsize, tile_rows_override, per_buf_bytes):
    """Chunk / step / tile / sub-block geometry for the folded (rows, lane) array."""
    # Sub-block rows bound the live f32 temporaries (~3 copies) to a couple of MiB.
    sub_rows = max(8, min(512, ((2 * 1024 * 1024) // max(1, lane * 4)) // 8 * 8))

    # Leading parallel axis: 2 chunks feeds both TensorCores on v7x; harmless elsewhere.
    num_chunks = 2 if _round_up(folded_rows, 8) >= 16 else 1
    per_chunk = -(-folded_rows // num_chunks)
    target = _round_up(per_chunk, 8)

    if tile_rows_override is not None:
        tile_rows = int(tile_rows_override)
        assert tile_rows >= 8 and tile_rows % 8 == 0, "tile_rows must be a multiple of 8"
    else:
        cap_rows = per_buf_bytes // max(1, lane * itemsize)
        cap_rows = max(sub_rows, (cap_rows // sub_rows) * sub_rows)
        if target <= cap_rows:
            tile_rows = target if target <= sub_rows else _round_up(target, sub_rows)
        else:
            tile_rows = cap_rows

    sub_rows = min(sub_rows, tile_rows)
    while tile_rows % sub_rows != 0:
        sub_rows -= 8

    steps = -(-per_chunk // tile_rows)
    rows_per_chunk = steps * tile_rows
    total_rows = num_chunks * rows_per_chunk
    return num_chunks, steps, tile_rows, sub_rows, rows_per_chunk, total_rows


def _spread_stats_kernel(z_ref, out_ref, pilot_ref, sum_ref, ssq_ref, *,
                         lane, tile_rows, sub_rows, steps, rows_per_chunk,
                         valid_rows, needs_mask):
    """One grid step: accumulate pilot-shifted per-column (sum, sumsq) for one chunk.

    z_ref:   (tile_rows, lane) native-dtype tile of the lane-folded input.
    out_ref: (1, 24, lane) f32 per-chunk partials: rows [0:8]=pilot, [8:16]=sum,
             [16:24]=sumsq (sublane collapse happens in the wrapper).
    pilot_ref/sum_ref/ssq_ref: (8, lane) f32 persistent VMEM scratch (per core).
    """
    c = pl.program_id(0)          # batch chunk (parallel across TensorCores)
    s = pl.program_id(1)          # streaming step within the chunk (arbitrary)

    @pl.when(s == 0)
    def _init():
        # Pilot shift = first row of the chunk, pre-broadcast to 8 sublanes so the
        # per-sub-block subtract is a plain vreg-aligned VPU op (no per-tile bcast).
        row0 = z_ref[pl.ds(0, 1), :].astype(jnp.float32)
        pilot_ref[...] = jnp.broadcast_to(row0, (8, lane))
        sum_ref[...] = jnp.zeros_like(sum_ref)
        ssq_ref[...] = jnp.zeros_like(ssq_ref)

    tile_start = c * rows_per_chunk + s * tile_rows   # global folded-row offset

    def _accumulate(off):
        # Load a sub-block (bounds the f32 temporaries) and fold its rows, 8 at a time,
        # into the (8, lane) accumulators with plain VPU adds (no MXU weight pushes).
        zb = z_ref[pl.ds(off, sub_rows), :].astype(jnp.float32)
        pilot = pilot_ref[...]
        s_acc = sum_ref[...]
        q_acc = ssq_ref[...]
        for j in range(sub_rows // 8):
            blk = zb[j * 8:(j + 1) * 8, :] - pilot
            if needs_mask:
                rid = (tile_start + off + j * 8
                       + lax.broadcasted_iota(jnp.int32, (8, lane), 0))
                blk = jnp.where(rid < valid_rows, blk, 0.0)
            s_acc = s_acc + blk
            q_acc = q_acc + blk * blk
        sum_ref[...] = s_acc
        ssq_ref[...] = q_acc

    n_sub = tile_rows // sub_rows
    if n_sub == 1:
        _accumulate(0)
    else:
        def _body(i, carry):
            _accumulate(pl.multiple_of(i * sub_rows, sub_rows))
            return carry
        lax.fori_loop(0, n_sub, _body, 0)

    @pl.when(s == steps - 1)
    def _finalize():
        out_ref[0, 0:8, :] = pilot_ref[...]
        out_ref[0, 8:16, :] = sum_ref[...]
        out_ref[0, 16:24, :] = ssq_ref[...]


def latent_spread_loss(z: jax.Array, spread_lambda: float = SPREAD_LAMBDA,
                       tile_rows: int | None = None) -> jax.Array:
    """Scalar f32 loss matching Latent_Spread_Loss.forward(z), z of shape (B, D)."""
    assert z.ndim == 2, "expected z of shape (batch, latent_dim)"
    batch, feat = z.shape
    assert batch >= 2, "variance over the batch needs at least 2 samples"

    groups = _pick_group_fold(batch, feat)
    folded_rows = batch // groups
    lane = groups * feat
    zf = z.reshape(folded_rows, lane)                       # lane-dense fold

    vmem_limit, per_buf = _vmem_limits()
    (num_chunks, steps, tr, sub_rows, rows_per_chunk, total_rows) = _plan(
        folded_rows, lane, z.dtype.itemsize, tile_rows, per_buf)

    needs_mask = total_rows != folded_rows
    if needs_mask:
        zf = jnp.pad(zf, ((0, total_rows - folded_rows), (0, 0)))

    kernel = functools.partial(
        _spread_stats_kernel,
        lane=lane, tile_rows=tr, sub_rows=sub_rows, steps=steps,
        rows_per_chunk=rows_per_chunk, valid_rows=folded_rows,
        needs_mask=needs_mask)

    stats = pl.pallas_call(
        kernel,
        out_shape=jax.ShapeDtypeStruct((num_chunks, 24, lane), jnp.float32),
        grid_spec=pltpu.PrefetchScalarGridSpec(
            num_scalar_prefetch=0,
            grid=(num_chunks, steps),
            in_specs=[pl.BlockSpec((tr, lane), lambda c, s: (c * steps + s, 0))],
            out_specs=pl.BlockSpec((1, 24, lane), lambda c, s: (c, 0, 0)),
            scratch_shapes=[pltpu.VMEM((8, lane), jnp.float32)] * 3,
        ),
        compiler_params=pltpu.CompilerParams(
            dimension_semantics=("parallel", "arbitrary"),
            vmem_limit_bytes=vmem_limit,
        ),
    )(zf)

    # ---- Chan parallel-variance combine over (chunk, lane-group) partitions, in JAX ----
    counts = jnp.asarray(
        [min(max(folded_rows - c * rows_per_chunk, 0), rows_per_chunk)
         for c in range(num_chunks)], dtype=jnp.float32)          # valid rows per chunk
    pilot = stats[:, 0, :]                                        # (C, lane)
    ssum = jnp.sum(stats[:, 8:16, :], axis=1)                     # (C, lane)
    ssq = jnp.sum(stats[:, 16:24, :], axis=1)                     # (C, lane)

    n = jnp.maximum(counts[:, None], 1.0)
    mean_col = pilot + ssum / n                                   # per-column mean
    m2_col = ssq - (ssum * ssum) / n                              # per-column sum sq dev

    mean = mean_col.reshape(num_chunks, groups, feat)
    m2 = m2_col.reshape(num_chunks, groups, feat)
    w = counts[:, None, None]

    total_n = float(batch)
    grand = jnp.sum(w * mean, axis=(0, 1)) / total_n              # per-feature mean
    m2_tot = jnp.sum(m2, axis=(0, 1)) + jnp.sum(w * (mean - grand) ** 2, axis=(0, 1))
    var = jnp.maximum(m2_tot, 0.0) / (total_n - 1.0)              # unbiased, clamped >= 0
    return spread_lambda / (jnp.mean(var) + EPS)


def _reference(z: jax.Array, spread_lambda: float = SPREAD_LAMBDA) -> jax.Array:
    zf32 = z.astype(jnp.float32)
    var = jnp.var(zf32, axis=0, ddof=1)       # unbiased, matches torch.var default
    return spread_lambda / (jnp.mean(var) + EPS)


if __name__ == "__main__":
    key = jax.random.PRNGKey(0)
    k1, k2, k3, k4, k5 = jax.random.split(key, 5)

    def check(z, tile_rows=None, rtol=1e-5, atol=1e-6):
        got = latent_spread_loss(z, tile_rows=tile_rows)
        jax.block_until_ready(got)
        want = _reference(z)
        assert jnp.allclose(got, want, rtol=rtol, atol=atol), (got, want)

    # (1) Lane-folded single-step path: (64, 32) -> folded (16, 128), 2 chunks x 1 step.
    check(jax.random.normal(k1, (64, 32), jnp.float32) * 0.7 + 1.5)

    # (2) Multi-step streaming path: forced 8-row folded tiles -> 2 chunks x 2 steps.
    check(jax.random.normal(k2, (128, 32), jnp.float32) * 2.0 - 3.0, tile_rows=8)

    # (3) Native bf16 streaming (f32 accumulation in-kernel).
    z3 = jax.random.normal(k3, (128, 32), jnp.float32).astype(jnp.bfloat16)
    check(z3, tile_rows=8, rtol=1e-3, atol=1e-4)

    # (4) Ragged folded batch: 120/G=4 -> 30 rows, zero-padded to 32 and masked.
    check(jax.random.normal(k4, (120, 32), jnp.float32) * 1.3 + 0.2)

    # (5) Wide lane fold: D=48 -> G=8, lane width 384 (3 x 128), single chunk.
    check(jax.random.normal(k5, (64, 48), jnp.float32) * 0.5 - 1.0)

    print("KERNEL_OK")
</pallas_src>

<mosaic_0001>
module attributes {stable_mosaic.version = 11 : i64} {
  func.func @_spread_stats_kernel(%arg0: i32, %arg1: i32, %arg2: memref<8x128xf32, #tpu.memory_space<vmem>>, %arg3: memref<1x24x128xf32, #tpu.memory_space<vmem>>, %arg4: memref<8x128xf32, #tpu.memory_space<vmem>>, %arg5: memref<8x128xf32, #tpu.memory_space<vmem>>, %arg6: memref<8x128xf32, #tpu.memory_space<vmem>>) attributes {dimension_semantics = [#tpu.dimension_semantics<parallel>, #tpu.dimension_semantics<arbitrary>], iteration_bounds = array<i64: 2, 1>, scalar_prefetch = 0 : i64, scratch_operands = 3 : i64, tpu.core_type = #tpu.core_type<tc>, window_params = [{transform_indices = @transform_0, window_bounds = array<i64: 8, 128>}, {transform_indices = @transform_1, window_bounds = array<i64: 1, 24, 128>}]} {
    %c0_i32 = arith.constant 0 : i32
    %0 = arith.cmpi eq, %arg1, %c0_i32 : i32
    %1 = arith.extui %0 : i1 to i32
    %c0_i32_0 = arith.constant 0 : i32
    %2 = arith.cmpi ne, %1, %c0_i32_0 : i32
    scf.if %2 {
      %c0_14 = arith.constant 0 : index
      %c0_15 = arith.constant 0 : index
      %16 = vector.load %arg2[%c0_14, %c0_15] : memref<8x128xf32, #tpu.memory_space<vmem>>, vector<1x128xf32>
      %17 = vector.shape_cast %16 : vector<1x128xf32> to vector<1x128xf32>
      %18 = vector.broadcast %17 : vector<1x128xf32> to vector<8x128xf32>
      %c0_16 = arith.constant 0 : index
      %c0_17 = arith.constant 0 : index
      %19 = vector.load %arg4[%c0_16, %c0_17] : memref<8x128xf32, #tpu.memory_space<vmem>>, vector<8x128xf32>
      tpu.vector_store %arg4[%c0_16, %c0_17], %18 {strides = array<i32>} : memref<8x128xf32, #tpu.memory_space<vmem>>, vector<8x128xf32>,
      %cst = arith.constant 0.000000e+00 : f32
      %20 = vector.broadcast %cst : f32 to vector<8x128xf32>
      %c0_18 = arith.constant 0 : index
      %c0_19 = arith.constant 0 : index
      %21 = vector.load %arg5[%c0_18, %c0_19] : memref<8x128xf32, #tpu.memory_space<vmem>>, vector<8x128xf32>
      tpu.vector_store %arg5[%c0_18, %c0_19], %20 {strides = array<i32>} : memref<8x128xf32, #tpu.memory_space<vmem>>, vector<8x128xf32>,
      %cst_20 = arith.constant 0.000000e+00 : f32
      %22 = vector.broadcast %cst_20 : f32 to vector<8x128xf32>
      %c0_21 = arith.constant 0 : index
      %c0_22 = arith.constant 0 : index
      %23 = vector.load %arg6[%c0_21, %c0_22] : memref<8x128xf32, #tpu.memory_space<vmem>>, vector<8x128xf32>
      tpu.vector_store %arg6[%c0_21, %c0_22], %22 {strides = array<i32>} : memref<8x128xf32, #tpu.memory_space<vmem>>, vector<8x128xf32>,
    } else {
    }
    %c0 = arith.constant 0 : index
    %c0_1 = arith.constant 0 : index
    %3 = vector.load %arg2[%c0, %c0_1] : memref<8x128xf32, #tpu.memory_space<vmem>>, vector<8x128xf32>
    %c0_2 = arith.constant 0 : index
    %c0_3 = arith.constant 0 : index
    %4 = vector.load %arg4[%c0_2, %c0_3] : memref<8x128xf32, #tpu.memory_space<vmem>>, vector<8x128xf32>
    %c0_4 = arith.constant 0 : index
    %c0_5 = arith.constant 0 : index
    %5 = vector.load %arg5[%c0_4, %c0_5] : memref<8x128xf32, #tpu.memory_space<vmem>>, vector<8x128xf32>
    %c0_6 = arith.constant 0 : index
    %c0_7 = arith.constant 0 : index
    %6 = vector.load %arg6[%c0_6, %c0_7] : memref<8x128xf32, #tpu.memory_space<vmem>>, vector<8x128xf32>
    %7 = arith.subf %3, %4 : vector<8x128xf32>
    %8 = arith.addf %5, %7 : vector<8x128xf32>
    %9 = arith.mulf %7, %7 : vector<8x128xf32>
    %10 = arith.addf %6, %9 : vector<8x128xf32>
    %c0_8 = arith.constant 0 : index
    %c0_9 = arith.constant 0 : index
    %11 = vector.load %arg5[%c0_8, %c0_9] : memref<8x128xf32, #tpu.memory_space<vmem>>, vector<8x128xf32>
    tpu.vector_store %arg5[%c0_8, %c0_9], %8 {strides = array<i32>} : memref<8x128xf32, #tpu.memory_space<vmem>>, vector<8x128xf32>,
    %c0_10 = arith.constant 0 : index
    %c0_11 = arith.constant 0 : index
    %12 = vector.load %arg6[%c0_10, %c0_11] : memref<8x128xf32, #tpu.memory_space<vmem>>, vector<8x128xf32>
    tpu.vector_store %arg6[%c0_10, %c0_11], %10 {strides = array<i32>} : memref<8x128xf32, #tpu.memory_space<vmem>>, vector<8x128xf32>,
    %c0_i32_12 = arith.constant 0 : i32
    %13 = arith.cmpi eq, %arg1, %c0_i32_12 : i32
    %14 = arith.extui %13 : i1 to i32
    %c0_i32_13 = arith.constant 0 : i32
    %15 = arith.cmpi ne, %14, %c0_i32_13 : i32
    scf.if %15 {
      %c0_14 = arith.constant 0 : index
      %c0_15 = arith.constant 0 : index
      %16 = vector.load %arg4[%c0_14, %c0_15] : memref<8x128xf32, #tpu.memory_space<vmem>>, vector<8x128xf32>
      %c0_16 = arith.constant 0 : index
      %c0_17 = arith.constant 0 : index
      %c0_18 = arith.constant 0 : index
      %17 = vector.load %arg3[%c0_16, %c0_17, %c0_18] : memref<1x24x128xf32, #tpu.memory_space<vmem>>, vector<1x8x128xf32>
      %18 = vector.shape_cast %17 : vector<1x8x128xf32> to vector<8x128xf32>
      %19 = vector.shape_cast %16 : vector<8x128xf32> to vector<1x8x128xf32>
      tpu.vector_store %arg3[%c0_16, %c0_17, %c0_18], %19 {strides = array<i32>} : memref<1x24x128xf32, #tpu.memory_space<vmem>>, vector<1x8x128xf32>,
      %c0_19 = arith.constant 0 : index
      %c0_20 = arith.constant 0 : index
      %20 = vector.load %arg5[%c0_19, %c0_20] : memref<8x128xf32, #tpu.memory_space<vmem>>, vector<8x128xf32>
      %c0_21 = arith.constant 0 : index
      %c8 = arith.constant 8 : index
      %c0_22 = arith.constant 0 : index
      %21 = vector.load %arg3[%c0_21, %c8, %c0_22] : memref<1x24x128xf32, #tpu.memory_space<vmem>>, vector<1x8x128xf32>
      %22 = vector.shape_cast %21 : vector<1x8x128xf32> to vector<8x128xf32>
      %23 = vector.shape_cast %20 : vector<8x128xf32> to vector<1x8x128xf32>
      tpu.vector_store %arg3[%c0_21, %c8, %c0_22], %23 {strides = array<i32>} : memref<1x24x128xf32, #tpu.memory_space<vmem>>, vector<1x8x128xf32>,
      %c0_23 = arith.constant 0 : index
      %c0_24 = arith.constant 0 : index
      %24 = vector.load %arg6[%c0_23, %c0_24] : memref<8x128xf32, #tpu.memory_space<vmem>>, vector<8x128xf32>
      %c0_25 = arith.constant 0 : index
      %c16 = arith.constant 16 : index
      %c0_26 = arith.constant 0 : index
      %25 = vector.load %arg3[%c0_25, %c16, %c0_26] : memref<1x24x128xf32, #tpu.memory_space<vmem>>, vector<1x8x128xf32>
      %26 = vector.shape_cast %25 : vector<1x8x128xf32> to vector<8x128xf32>
      %27 = vector.shape_cast %24 : vector<8x128xf32> to vector<1x8x128xf32>
      tpu.vector_store %arg3[%c0_25, %c16, %c0_26], %27 {strides = array<i32>} : memref<1x24x128xf32, #tpu.memory_space<vmem>>, vector<1x8x128xf32>,
    } else {
    }
    return
  }
  func.func @transform_0(%arg0: i32, %arg1: i32) -> (i32, i32) {
    %c1_i32 = arith.constant 1 : i32
    %0 = arith.muli %arg0, %c1_i32 : i32
    %1 = arith.addi %0, %arg1 : i32
    %c0_i32 = arith.constant 0 : i32
    %c0_i32_0 = arith.constant 0 : i32
    return %1, %c0_i32 : i32, i32
  }
  func.func @transform_1(%arg0: i32, %arg1: i32) -> (i32, i32, i32) {
    %c0_i32 = arith.constant 0 : i32
    %c0_i32_0 = arith.constant 0 : i32
    %c0_i32_1 = arith.constant 0 : i32
    return %arg0, %c0_i32, %c0_i32_0 : i32, i32, i32
  }
}

</mosaic_0001>

<llo_original>
// kernel: tpu_custom_call.1
$region0: #{tpu_custom_call.1}
  #allocation0 [shape = 'u32[]', space=smem, size = 0x4, offset = 0x4, fixed_abs, tag = 'smem constant byte address 0x4 - core index']
  #allocation1 [shape = 'u32[72,128]{1,0:T(1,128)}', space=vmem, size = 0x9000, scoped, tag = 'internal scratch']
  #allocation2 [shape = 'f32[8,128]{1,0:T(8,128)}', space=vmem, size = 0x1000, scoped, tag = 'scratch operand']
  #allocation3 [shape = 'f32[8,128]{1,0:T(8,128)}', space=vmem, size = 0x1000, scoped, tag = 'scratch operand']
  #allocation4 [shape = 'f32[8,128]{1,0:T(8,128)}', space=vmem, size = 0x1000, scoped, tag = 'scratch operand']
  %s0 = inlined_call_operand.hbm [shape: f32[16,128], index: 0, kind: input, shape index: {}]
  %s1 = inlined_call_operand.hbm [shape: f32[2,24,128], index: 1, kind: output, shape index: {}]
  %s2 = sld [smem:[#allocation0]]
  $region49: #{tpu_custom_call.1} parent=0
    _
  %s4 = ssub.s32 1, %s2
  %s5 = scalar_select 0, %s4, %s2
  $region1: #{tpu_custom_call.1} parent=0
    #allocation5 [shape = 'u8[8192]{0}', space=vmem, size = 0x2000, scoped, tag = 'input window, operand 0']
    #allocation6 [shape = 's32[2]{0}', space=sflag, size = 0x8, scoped, tag = 'scoped memory for tpu_custom_call.1']
    #allocation7 [shape = 's32[2]{0}', space=sflag, size = 0x8, scoped, tag = 'scoped memory for tpu_custom_call.1']
    #allocation8 [shape = 'u8[24576]{0}', space=vmem, size = 0x6000, scoped, tag = 'output window, operand 0']
    %6 = vsyncpa [#allocation6], 0
    %s7 = scalar_lea.sflag [#allocation6], 1
    %8 = vsyncpa %s7, 0
    %9 = vsyncpa [#allocation7], 0
    %s10 = scalar_lea.sflag [#allocation7], 1
    %11 = vsyncpa %s10, 0
    loop: start=0, step=1, limit=4
    $region2: #{tpu_custom_call.1} parent=1 // loop_pre_header
      _
    $region3: #{tpu_custom_call.1} parent=1 // loop_header
      %s13 = sphi 0, %s17
      %p14 = scmp.ge.s32.totalorder %s13, 4
      %s20 = sphi 0, %s32
      %s21 = sphi 0, %s28
      %s22 = sphi 0, %s20
      %s23 = sphi 0, %s21
      %s24 = sphi 0, %s22
      %s25 = sphi 0, %s23
      %s37 = sphi 0, %s39
      %s40 = sphi 0, %s37
      %s41 = sphi 0, %s40
      %s57 = sphi 0, %s41
      %s63 = sphi 0, %s65
      %s66 = sphi 0, %s63
      %s67 = sphi 0, %s66
      %s83 = sphi 0, %s67
    $region4: #{tpu_custom_call.1} parent=1 // loop_header_branch
      %16 = sbr.rel (%p14) target = $region8
    $region5: #{tpu_custom_call.1} parent=1 // loop_body
      %s18 = ssub.s32 %s13, 1
      %s19 = ssub.s32 %s13, 2
      %s26 = sadd.s32 1, %s21
      %p27 = scmp.ge.s32.totalorder %s26, 1
      %s28 = scalar_select %p27, 0, %s26
      %s29 = sadd.s32 1, %s20
      %s30 = scalar_select %p27, %s29, %s20
      %p31 = scmp.ge.s32.totalorder %s30, 2
      %s32 = scalar_select %p31, 0, %s30
      %s33 = sadd.s32 %s20, %s21
      %s34 = sadd.s32 %s32, %s28
      %s35 = ssub.s32 %s33, %s34
      %p36 = scmp.eq.s32.totalorder %s35, 0
      %s38 = sadd.s32 %s37, 1
      %s39 = scalar_select %p36, %s37, %s38
      %p42 = pneg %p36
      %p43 = scmp.eq.s32.totalorder %s13, 1
      %p44 = por %p42, %p43
      %p45 = scmp.ne.s32.totalorder %s37, %s40
      %p46 = scmp.eq.s32.totalorder %s13, 0
      %p47 = por %p45, %p46
      %p48 = scmp.ne.s32.totalorder %s37, %s40
      %p49 = scmp.eq.s32.totalorder %s18, 1
      %p50 = por %p48, %p49
      %p51 = scmp.ne.s32.totalorder %s40, %s41
      %p52 = scmp.eq.s32.totalorder %s18, 0
      %p53 = por %p51, %p52
      %p54 = scmp.ne.s32.totalorder %s40, %s41
      %p55 = scmp.eq.s32.totalorder %s19, 1
      %p56 = por %p54, %p55
      %p58 = scmp.ne.s32.totalorder %s41, %s57
      %p59 = scmp.eq.s32.totalorder %s19, 0
      %p60 = por %p58, %p59
      %s61 = ssub.s32 %s20, %s32
      %p62 = scmp.eq.s32.totalorder %s61, 0
      %s64 = sadd.s32 %s63, 1
      %s65 = scalar_select %p62, %s63, %s64
      %p68 = pneg %p62
      %p69 = scmp.eq.s32.totalorder %s13, 1
      %p70 = por %p68, %p69
      %p71 = scmp.ne.s32.totalorder %s63, %s66
      %p72 = scmp.eq.s32.totalorder %s13, 0
      %p73 = por %p71, %p72
      %p74 = scmp.ne.s32.totalorder %s63, %s66
      %p75 = scmp.eq.s32.totalorder %s18, 1
      %p76 = por %p74, %p75
      %p77 = scmp.ne.s32.totalorder %s66, %s67
      %p78 = scmp.eq.s32.totalorder %s18, 0
      %p79 = por %p77, %p78
      %p80 = scmp.ne.s32.totalorder %s66, %s67
      %p81 = scmp.eq.s32.totalorder %s19, 1
      %p82 = por %p80, %p81
      %p84 = scmp.ne.s32.totalorder %s67, %s83
      %p85 = scmp.eq.s32.totalorder %s19, 0
      %p86 = por %p84, %p85
      %p87 = scmp.le.s32.totalorder 1, %s13
      %p88 = scmp.lt.s32.totalorder %s13, 3
      %p89 = pnand %p87, %p88
      %p90 = pneg %p89
      // Predicated region
      $region9: #{tpu_custom_call.1} parent=5 // pred_check
        _
      $region10: #{tpu_custom_call.1} parent=5 // pred_check_branch
        %92 = sbr.rel (%p89) target = $region12
      $region11: #{tpu_custom_call.1} parent=5 // pred_region
        %s93 = ssub.s32 %s13, 1
      $region12: #{tpu_custom_call.1} parent=5 // pred_fallthru
        _
      %p94 = scmp.lt.s32.totalorder %s13, 2
      // Predicated region
      $region13: #{tpu_custom_call.1} parent=5 // pred_check
        %p95 = pneg %p94
      $region14: #{tpu_custom_call.1} parent=5 // pred_check_branch
        %97 = sbr.rel (%p95) target = $region16
      $region15: #{tpu_custom_call.1} parent=5 // pred_region
        // Predicated region
        $region17: #{tpu_custom_call.1} parent=15 // pred_check
          %p98 = pneg %p47
        $region18: #{tpu_custom_call.1} parent=15 // pred_check_branch
          %100 = sbr.rel (%p98) target = $region20
        $region19: #{tpu_custom_call.1} parent=15 // pred_region
          %s101 = sand.u32 %s37, 1
          %s102 = scalar_lea.sflag [#allocation6], %s101
          %s103 = sand.u32 %s37, 1
          %s104 = smul.addr %s103, 8
          %s105 = scalar_lea.vmem [#allocation5], %s104
          %s106 = sadd.s32 %s20, %s21
          %108 = vsyncadd %s102, 0
          %s109 = smul.addr %s106, 8
          %s110 = scalar_lea.hbm %s0, %s109
          %s112 = sshll.u32 %s110, 4
          %s113 = int_to_ptr.hbm [resolvable:$true] %s112
          %s114 = sshll.u32 %s105, 4
          %s115 = int_to_ptr.vmem [resolvable:$true] %s114
          %117 = dma.hbm_to_vmem [thread:$0]  %s113, 128, %s115, %s102
        $region20: #{tpu_custom_call.1} parent=15 // pred_fallthru
          _
      $region16: #{tpu_custom_call.1} parent=5 // pred_fallthru
        _
      %p118 = scmp.le.s32.totalorder 1, %s13
      %p119 = scmp.lt.s32.totalorder %s13, 3
      %p120 = pnand %p118, %p119
      %p121 = pneg %p120
      // Predicated region
      $region21: #{tpu_custom_call.1} parent=5 // pred_check
        _
      $region22: #{tpu_custom_call.1} parent=5 // pred_check_branch
        %123 = sbr.rel (%p120) target = $region24
      $region23: #{tpu_custom_call.1} parent=5 // pred_region
        %s124 = ssub.s32 %s13, 1
        %s125 = sand.u32 %s40, 1
        %s126 = scalar_lea.sflag [#allocation6], %s125
        %s127 = sand.u32 %s40, 1
        %s128 = smul.addr %s127, 8
        %s129 = scalar_lea.vmem [#allocation5], %s128
        // Predicated region
        $region25: #{tpu_custom_call.1} parent=23 // pred_check
          %p130 = pneg %p53
        $region26: #{tpu_custom_call.1} parent=23 // pred_check_branch
          %132 = sbr.rel (%p130) target = $region28
        $region27: #{tpu_custom_call.1} parent=23 // pred_region
          %134 = dma.done %s126, 128
        $region28: #{tpu_custom_call.1} parent=23 // pred_fallthru
          _
        %s135 = sand.u32 %s40, 1
        %s136 = scalar_lea.sflag [#allocation6], %s135
        %s137 = sand.u32 %s40, 1
        %s138 = smul.addr %s137, 8
        %s139 = scalar_lea.vmem [#allocation5], %s138
        %p140 = pneg %p53
        %p141 = pneg %p50
        %p142 = pneg %p79
        %p143 = pneg %p76
        %s144 = sand.u32 %s66, 1
        %s145 = scalar_lea.sflag [#allocation7], %s144
        %s146 = sand.u32 %s66, 1
        %s147 = smul.addr %s146, 24
        %s148 = scalar_lea.vmem [#allocation8], %s147
        %s149 = sadd.s32 %s22, %s23
        %p150 = scmp.eq.s32.totalorder %s23, 0
        // Predicated region
        $region29: #{tpu_custom_call.1} parent=23 // pred_check
          %p151 = pneg %p150
        $region30: #{tpu_custom_call.1} parent=23 // pred_check_branch
          %153 = sbr.rel (%p151) target = $region32
        $region31: #{tpu_custom_call.1} parent=23 // pred_region
          %v154 = vld [vmem:[%s129] sm:$0x1]
          %v155 = vperm.slane %v154, 0
          %156 = vst [vmem:[#allocation2] sm:$0xff] %v155
          %157 = vst [vmem:[#allocation3] sm:$0xff] 0.0
          %158 = vst [vmem:[#allocation4] sm:$0xff] 0.0
        $region32: #{tpu_custom_call.1} parent=23 // pred_fallthru
          _
        %v159 = vld [vmem:[%s129] sm:$0xff]
        %v160 = vld [vmem:[#allocation2] sm:$0xff]
        %v161 = vld [vmem:[#allocation3] sm:$0xff]
        %v162 = vld [vmem:[#allocation4] sm:$0xff]
        %v163 = vsub.f32 %v159, %v160
        %v164 = vadd.f32 %v161, %v163
        %v165 = vmul.f32 %v163, %v163
        %v166 = vadd.f32 %v162, %v165
        %167 = vst [vmem:[#allocation3] sm:$0xff] %v164
        %168 = vst [vmem:[#allocation4] sm:$0xff] %v166
        // Predicated region
        $region33: #{tpu_custom_call.1} parent=23 // pred_check
          %p169 = pneg %p150
        $region34: #{tpu_custom_call.1} parent=23 // pred_check_branch
          %171 = sbr.rel (%p169) target = $region36
        $region35: #{tpu_custom_call.1} parent=23 // pred_region
          %v172 = vld [vmem:[#allocation2] sm:$0xff]
          %173 = vst [vmem:[%s148] sm:$0xff] %v172
          %v174 = vld [vmem:[#allocation3] sm:$0xff]
          %175 = vst [vmem:[%s148 + $0x8] sm:$0xff] %v174
          %v176 = vld [vmem:[#allocation4] sm:$0xff]
          %177 = vst [vmem:[%s148 + $0x10] sm:$0xff] %v176
        $region36: #{tpu_custom_call.1} parent=23 // pred_fallthru
          _
        %s178 = sand.u32 %s66, 1
        %s179 = scalar_lea.sflag [#allocation7], %s178
        %s180 = sand.u32 %s66, 1
        %s181 = smul.addr %s180, 24
        %s182 = scalar_lea.vmem [#allocation8], %s181
        // Predicated region
        $region37: #{tpu_custom_call.1} parent=23 // pred_check
          %p183 = pneg %p76
        $region38: #{tpu_custom_call.1} parent=23 // pred_check_branch
          %185 = sbr.rel (%p183) target = $region40
        $region39: #{tpu_custom_call.1} parent=23 // pred_region
          %187 = vsyncadd %s179, 0
          %s188 = smul.addr %s22, 3
          %s189 = smul.addr %s188, 8
          %s190 = scalar_lea.hbm %s1, %s189
          %s191 = sshll.u32 %s182, 4
          %s192 = int_to_ptr.vmem [resolvable:$true] %s191
          %s193 = sshll.u32 %s190, 4
          %s194 = int_to_ptr.hbm [resolvable:$true] %s193
          %199 = dma.vmem_to_hbm [thread:$0]  %s192, 384, %s194, %s179, 128, 128, 8
        $region40: #{tpu_custom_call.1} parent=23 // pred_fallthru
          _
      $region24: #{tpu_custom_call.1} parent=5 // pred_fallthru
        _
      %p200 = scmp.le.s32.totalorder 2, %s13
      // Predicated region
      $region41: #{tpu_custom_call.1} parent=5 // pred_check
        %p201 = pneg %p200
      $region42: #{tpu_custom_call.1} parent=5 // pred_check_branch
        %203 = sbr.rel (%p201) target = $region44
      $region43: #{tpu_custom_call.1} parent=5 // pred_region
        %s204 = ssub.s32 %s13, 2
        // Predicated region
        $region45: #{tpu_custom_call.1} parent=43 // pred_check
          %p205 = pneg %p82
        $region46: #{tpu_custom_call.1} parent=43 // pred_check_branch
          %207 = sbr.rel (%p205) target = $region48
        $region47: #{tpu_custom_call.1} parent=43 // pred_region
          %s208 = sand.u32 %s67, 1
          %s209 = scalar_lea.sflag [#allocation7], %s208
          %s210 = sand.u32 %s67, 1
          %s211 = smul.addr %s210, 24
          %s212 = scalar_lea.vmem [#allocation8], %s211
          %214 = dma.done %s209, 384
        $region48: #{tpu_custom_call.1} parent=43 // pred_fallthru
          _
      $region44: #{tpu_custom_call.1} parent=5 // pred_fallthru
        _
    $region6: #{tpu_custom_call.1} parent=1 // loop_footer
      %s17 = sadd.s32 1, %s13
    $region7: #{tpu_custom_call.1} parent=1 // loop_footer_branch
      %12 = sbr.rel target = $region3
    $region8: #{tpu_custom_call.1} parent=1 // loop_exit
      _
    %215 = vsyncpa [#allocation6], 1
    %s216 = scalar_lea.sflag [#allocation6], 1
    %217 = vsyncpa %s216, 1
    %218 = vsyncpa [#allocation7], 1
    %s219 = scalar_lea.sflag [#allocation7], 1
    %220 = vsyncpa %s219, 1

</llo_original>
